<compile_context>
chip_gen: v7x
topology: tpu7x:2x2x1
jax: 0.10.0
libtpu: 0.0.40
codegen_flags: <defaults>
</compile_context>

<pallas_src>
import functools

import jax
import jax.numpy as jnp
import numpy as np
from jax import lax
from jax.experimental import pallas as pl
from jax.experimental.pallas import tpu as pltpu


def _round_up(x: int, m: int) -> int:
    return ((x + m - 1) // m) * m


# ----------------------------------------------------------------------------
# Pallas kernel
# ----------------------------------------------------------------------------
def multilabel_embed_kernel(idx_ref, table_ref, out_ref, *, num_labels, scale):
    """One batch tile.

    idx_ref:   [TB, L]      int32, offset-adjusted label ids (-1 on padded rows)
    table_ref: [V_pad, Dp]  f32, concatenated (zero-padded) embedding tables
    out_ref:   [TB, Dp]     f32
    """
    tb = idx_ref.shape[0]
    v = table_ref.shape[0]

    idx = idx_ref[...]                                      # [TB, L] int32
    lane_v = lax.broadcasted_iota(jnp.int32, (tb, v), 1)    # [TB, V] 0..V-1 along lanes

    # Multi-hot: one 1 per label slot per row.  Slots use disjoint offset
    # ranges, so summing the L one-hots is exact.  Padded rows (idx == -1)
    # never match and stay zero.  Accumulate in int32, cast to f32 once.
    hot_i = (lane_v == idx[:, 0:1]).astype(jnp.int32)
    for i in range(1, num_labels):                          # static unroll, L is tiny
        hot_i = hot_i + (lane_v == idx[:, i:i + 1]).astype(jnp.int32)
    hot = hot_i.astype(jnp.float32)

    # Single fused MXU matmul == gather + sum over all label slots at once.
    acc = jnp.dot(hot, table_ref[...], preferred_element_type=jnp.float32)
    if scale != 1.0:
        acc = acc * jnp.float32(scale)                      # compile-time constant
    out_ref[...] = acc.astype(out_ref.dtype)


# ----------------------------------------------------------------------------
# Wrapper
# ----------------------------------------------------------------------------
def multilabel_embed(x, tables, normalize=True):
    """x: int array [B, L] (or [B] -> treated as [B, 1]); tables: list of [n_i, D]."""
    if x.ndim == 1:
        x = x[:, None]
    B, L = x.shape
    assert L == len(tables)
    D = tables[0].shape[1]

    counts = [int(t.shape[0]) for t in tables]
    offsets = np.concatenate([[0], np.cumsum(counts)[:-1]]).astype(np.int32)
    V = int(sum(counts))

    # Lane-dense padded concatenated table (zero rows/cols contribute nothing).
    V_pad = _round_up(max(V, 1), 128)
    D_pad = _round_up(max(D, 1), 128)
    table = jnp.concatenate([t.astype(jnp.float32) for t in tables], axis=0)
    table_p = jnp.zeros((V_pad, D_pad), jnp.float32).at[:V, :D].set(table)

    # Offset-adjusted flat indices; padded batch rows get -1 (never match).
    flat = x.astype(jnp.int32) + jnp.asarray(offsets, jnp.int32)[None, :]
    TB = 128 if B >= 128 else 8
    B_pad = _round_up(B, TB)
    idx_p = jnp.full((B_pad, L), -1, jnp.int32).at[:B].set(flat)

    scale = float(L) ** (-0.5) if normalize else 1.0

    out = pl.pallas_call(
        functools.partial(multilabel_embed_kernel, num_labels=L, scale=scale),
        grid=(B_pad // TB,),
        in_specs=[
            pl.BlockSpec((TB, L), lambda b: (b, 0)),          # indices per batch tile
            pl.BlockSpec((V_pad, D_pad), lambda b: (0, 0)),   # table resident in VMEM
        ],
        out_specs=pl.BlockSpec((TB, D_pad), lambda b: (b, 0)),
        out_shape=jax.ShapeDtypeStruct((B_pad, D_pad), jnp.float32),
        compiler_params=pltpu.CompilerParams(
            dimension_semantics=("parallel",),
        ),
    )(idx_p, table_p)

    return out[:B, :D]


# ----------------------------------------------------------------------------
# Pure-JAX reference
# ----------------------------------------------------------------------------
def reference(x, tables, normalize=True):
    if x.ndim == 1:
        x = x[:, None]
    out = 0
    for i, t in enumerate(tables):
        out = out + t[x[:, i]]
    if normalize:
        out = out * (len(tables) ** (-0.5))
    return out


# ----------------------------------------------------------------------------
# Main
# ----------------------------------------------------------------------------
if __name__ == "__main__":
    key = jax.random.PRNGKey(0)

    label_counts = [5, 7, 11]   # small label vocabularies
    D = 32                      # output_dim
    B = 16                      # batch of multi-label rows

    tks = jax.random.split(key, 2 * len(label_counts))
    tables = [
        0.1 * jax.random.normal(tks[i], (n, D), jnp.float32)
        for i, n in enumerate(label_counts)
    ]
    x_cols = [
        jax.random.randint(tks[len(label_counts) + i], (B,), 0, n, dtype=jnp.int32)
        for i, n in enumerate(label_counts)
    ]
    x = jnp.stack(x_cols, axis=1)   # [B, L]

    out = multilabel_embed(x, tables, normalize=True)
    jax.block_until_ready(out)

    ref = reference(x, tables, normalize=True)
    np.testing.assert_allclose(np.asarray(out), np.asarray(ref), rtol=1e-5, atol=1e-5)

    print("KERNEL_OK")
</pallas_src>

<mosaic_0001>
module attributes {stable_mosaic.version = 11 : i64} {
  func.func @multilabel_embed_kernel(%arg0: i32, %arg1: memref<8x3xi32, #tpu.memory_space<vmem>>, %arg2: memref<128x128xf32, #tpu.memory_space<vmem>>, %arg3: memref<8x128xf32, #tpu.memory_space<vmem>>) attributes {dimension_semantics = [#tpu.dimension_semantics<parallel>], iteration_bounds = array<i64: 2>, scalar_prefetch = 0 : i64, scratch_operands = 0 : i64, tpu.core_type = #tpu.core_type<tc>, window_params = [{transform_indices = @transform_0, window_bounds = array<i64: 8, 3>}, {pipeline_mode = #tpu.pipeline_mode<synchronous>, transform_indices = @transform_1, window_bounds = array<i64: 128, 128>}, {transform_indices = @transform_2, window_bounds = array<i64: 8, 128>}]} {
    %c0 = arith.constant 0 : index
    %c0_0 = arith.constant 0 : index
    %0 = vector.load %arg1[%c0, %c0_0] : memref<8x3xi32, #tpu.memory_space<vmem>>, vector<8x3xi32>
    %1 = tpu.iota {dimensions = array<i32: 1>} : vector<8x128xi32>
    %2 = vector.extract_strided_slice %0 {offsets = [0, 0], sizes = [8, 1], strides = [1, 1]} : vector<8x3xi32> to vector<8x1xi32>
    %3 = vector.broadcast %2 : vector<8x1xi32> to vector<8x128xi32>
    %4 = arith.cmpi eq, %1, %3 : vector<8x128xi32>
    %5 = arith.extui %4 : vector<8x128xi1> to vector<8x128xi32>
    %6 = vector.extract_strided_slice %0 {offsets = [0, 1], sizes = [8, 1], strides = [1, 1]} : vector<8x3xi32> to vector<8x1xi32>
    %7 = vector.broadcast %6 : vector<8x1xi32> to vector<8x128xi32>
    %8 = arith.cmpi eq, %1, %7 : vector<8x128xi32>
    %9 = arith.extui %8 : vector<8x128xi1> to vector<8x128xi32>
    %10 = arith.addi %5, %9 : vector<8x128xi32>
    %11 = vector.extract_strided_slice %0 {offsets = [0, 2], sizes = [8, 1], strides = [1, 1]} : vector<8x3xi32> to vector<8x1xi32>
    %12 = vector.broadcast %11 : vector<8x1xi32> to vector<8x128xi32>
    %13 = arith.cmpi eq, %1, %12 : vector<8x128xi32>
    %14 = arith.extui %13 : vector<8x128xi1> to vector<8x128xi32>
    %15 = arith.addi %10, %14 : vector<8x128xi32>
    %16 = arith.sitofp %15 : vector<8x128xi32> to vector<8x128xf32>
    %c0_1 = arith.constant 0 : index
    %c0_2 = arith.constant 0 : index
    %17 = vector.load %arg2[%c0_1, %c0_2] : memref<128x128xf32, #tpu.memory_space<vmem>>, vector<128x128xf32>
    %cst = arith.constant dense<0.000000e+00> : vector<8x128xf32>
    %18 = tpu.matmul %16, %17, %cst {dimension_numbers = #tpu.dot_dimension_numbers<[1], [0], [0], [1], [0, 0, 1, 1], [], []>} : vector<8x128xf32>, vector<128x128xf32>, vector<8x128xf32> -> vector<8x128xf32>
    %cst_3 = arith.constant 0.577350259 : f32
    %19 = vector.broadcast %cst_3 : f32 to vector<8x128xf32>
    %20 = arith.mulf %18, %19 : vector<8x128xf32>
    %c0_4 = arith.constant 0 : index
    %c0_5 = arith.constant 0 : index
    %21 = vector.load %arg3[%c0_4, %c0_5] : memref<8x128xf32, #tpu.memory_space<vmem>>, vector<8x128xf32>
    tpu.vector_store %arg3[%c0_4, %c0_5], %20 {strides = array<i32>} : memref<8x128xf32, #tpu.memory_space<vmem>>, vector<8x128xf32>,
    return
  }
  func.func @transform_0(%arg0: i32) -> (i32, i32) {
    %c0_i32 = arith.constant 0 : i32
    %c0_i32_0 = arith.constant 0 : i32
    return %arg0, %c0_i32 : i32, i32
  }
  func.func @transform_1(%arg0: i32) -> (i32, i32) {
    %c0_i32 = arith.constant 0 : i32
    %c0_i32_0 = arith.constant 0 : i32
    %c0_i32_1 = arith.constant 0 : i32
    return %c0_i32, %c0_i32_0 : i32, i32
  }
  func.func @transform_2(%arg0: i32) -> (i32, i32) {
    %c0_i32 = arith.constant 0 : i32
    %c0_i32_0 = arith.constant 0 : i32
    return %arg0, %c0_i32 : i32, i32
  }
}

</mosaic_0001>

<llo_original>
// kernel: tpu_custom_call.1
$region0: #{tpu_custom_call.1}
  #allocation0 [shape = 'u32[]', space=smem, size = 0x4, offset = 0x4, fixed_abs, tag = 'smem constant byte address 0x4 - core index']
  #allocation1 [shape = 'u32[144,128]{1,0:T(1,128)}', space=vmem, size = 0x12000, scoped, tag = 'internal scratch']
  %s0 = inlined_call_operand.vmem [shape: s32[16,3], index: 0, kind: input, shape index: {}]
  %s1 = inlined_call_operand.hbm [shape: f32[128,128], index: 1, kind: input, shape index: {}]
  %s2 = inlined_call_operand.hbm [shape: f32[16,128], index: 2, kind: output, shape index: {}]
  %s3 = sld [smem:[#allocation0]]
  $region45: #{tpu_custom_call.1} parent=0
    _
  %s5 = ssub.s32 1, %s3
  %s6 = scalar_select 0, %s5, %s3
  $region1: #{tpu_custom_call.1} parent=0
    #allocation2 [shape = 'u8[65536]{0}', space=vmem, size = 0x10000, scoped, tag = 'input window, operand 1, single buffered']
    #allocation3 [shape = 's32[2]{0}', space=sflag, size = 0x8, scoped, tag = 'scoped memory for tpu_custom_call.1']
    #allocation4 [shape = 's32[2]{0}', space=sflag, size = 0x8, scoped, tag = 'scoped memory for tpu_custom_call.1']
    #allocation5 [shape = 'u8[8192]{0}', space=vmem, size = 0x2000, scoped, tag = 'output window, operand 0']
    %7 = vsyncpa [#allocation3], 0
    %8 = vsyncpa [#allocation4], 0
    %s9 = scalar_lea.sflag [#allocation4], 1
    %10 = vsyncpa %s9, 0
    loop: start=0, step=1, limit=4
    $region2: #{tpu_custom_call.1} parent=1 // loop_pre_header
      _
    $region3: #{tpu_custom_call.1} parent=1 // loop_header
      %s12 = sphi 0, %s16
      %p13 = scmp.ge.s32.totalorder %s12, 4
      %s22 = sphi 0, %s24
      %s25 = sphi 0, %s22
      %s26 = sphi 0, %s25
      %s42 = sphi 0, %s26
      %s46 = sphi 0, %s46
      %s48 = sphi 0, %s46
      %s49 = sphi 0, %s48
      %s63 = sphi 0, %s49
      %s69 = sphi 0, %s71
      %s72 = sphi 0, %s69
      %s73 = sphi 0, %s72
      %s89 = sphi 0, %s73
    $region4: #{tpu_custom_call.1} parent=1 // loop_header_branch
      %15 = sbr.rel (%p13) target = $region8
    $region5: #{tpu_custom_call.1} parent=1 // loop_body
      %s17 = ssub.s32 %s12, 1
      %s18 = ssub.s32 %s12, 2
      %s19 = sadd.s32 %s12, 1
      %s20 = ssub.s32 %s12, %s19
      %p21 = scmp.eq.s32.totalorder %s20, 0
      %s23 = sadd.s32 %s22, 1
      %s24 = scalar_select %p21, %s22, %s23
      %p27 = pneg %p21
      %p28 = scmp.eq.s32.totalorder %s12, 1
      %p29 = por %p27, %p28
      %p30 = scmp.ne.s32.totalorder %s22, %s25
      %p31 = scmp.eq.s32.totalorder %s12, 0
      %p32 = por %p30, %p31
      %p33 = scmp.ne.s32.totalorder %s22, %s25
      %p34 = scmp.eq.s32.totalorder %s17, 1
      %p35 = por %p33, %p34
      %p36 = scmp.ne.s32.totalorder %s25, %s26
      %p37 = scmp.eq.s32.totalorder %s17, 0
      %p38 = por %p36, %p37
      %p39 = scmp.ne.s32.totalorder %s25, %s26
      %p40 = scmp.eq.s32.totalorder %s18, 1
      %p41 = por %p39, %p40
      %p43 = scmp.ne.s32.totalorder %s26, %s42
      %p44 = scmp.eq.s32.totalorder %s18, 0
      %p45 = por %p43, %p44
      %s47 = sadd.s32 %s46, 1
      %p50 = scmp.eq.s32.totalorder %s12, 1
      %p51 = scmp.ne.s32.totalorder %s46, %s48
      %p52 = scmp.eq.s32.totalorder %s12, 0
      %p53 = por %p51, %p52
      %p54 = scmp.ne.s32.totalorder %s46, %s48
      %p55 = scmp.eq.s32.totalorder %s17, 1
      %p56 = por %p54, %p55
      %p57 = scmp.ne.s32.totalorder %s48, %s49
      %p58 = scmp.eq.s32.totalorder %s17, 0
      %p59 = por %p57, %p58
      %p60 = scmp.ne.s32.totalorder %s48, %s49
      %p61 = scmp.eq.s32.totalorder %s18, 1
      %p62 = por %p60, %p61
      %p64 = scmp.ne.s32.totalorder %s49, %s63
      %p65 = scmp.eq.s32.totalorder %s18, 0
      %p66 = por %p64, %p65
      %s67 = ssub.s32 %s12, %s19
      %p68 = scmp.eq.s32.totalorder %s67, 0
      %s70 = sadd.s32 %s69, 1
      %s71 = scalar_select %p68, %s69, %s70
      %p74 = pneg %p68
      %p75 = scmp.eq.s32.totalorder %s12, 1
      %p76 = por %p74, %p75
      %p77 = scmp.ne.s32.totalorder %s69, %s72
      %p78 = scmp.eq.s32.totalorder %s12, 0
      %p79 = por %p77, %p78
      %p80 = scmp.ne.s32.totalorder %s69, %s72
      %p81 = scmp.eq.s32.totalorder %s17, 1
      %p82 = por %p80, %p81
      %p83 = scmp.ne.s32.totalorder %s72, %s73
      %p84 = scmp.eq.s32.totalorder %s17, 0
      %p85 = por %p83, %p84
      %p86 = scmp.ne.s32.totalorder %s72, %s73
      %p87 = scmp.eq.s32.totalorder %s18, 1
      %p88 = por %p86, %p87
      %p90 = scmp.ne.s32.totalorder %s73, %s89
      %p91 = scmp.eq.s32.totalorder %s18, 0
      %p92 = por %p90, %p91
      %p93 = scmp.le.s32.totalorder 1, %s12
      %p94 = scmp.lt.s32.totalorder %s12, 3
      %p95 = pnand %p93, %p94
      %p96 = pneg %p95
      // Predicated region
      $region9: #{tpu_custom_call.1} parent=5 // pred_check
        _
      $region10: #{tpu_custom_call.1} parent=5 // pred_check_branch
        %98 = sbr.rel (%p95) target = $region12
      $region11: #{tpu_custom_call.1} parent=5 // pred_region
        %s99 = ssub.s32 %s12, 1
        // Predicated region
        $region13: #{tpu_custom_call.1} parent=11 // pred_check
          %p100 = pneg %p59
        $region14: #{tpu_custom_call.1} parent=11 // pred_check_branch
          %102 = sbr.rel (%p100) target = $region16
        $region15: #{tpu_custom_call.1} parent=11 // pred_region
          %s104 = ssub.s32 2048, 2048
          %105 = vsyncadd [#allocation3], %s104
          %s106 = sshll.u32 [#allocation2], 4
          %s107 = int_to_ptr.vmem [resolvable:$true] %s106
          %112 = dma.hbm_to_vmem [thread:$0]  %s1, 2048, %s107, [#allocation3], 128, 128, 8
        $region16: #{tpu_custom_call.1} parent=11 // pred_fallthru
          _
      $region12: #{tpu_custom_call.1} parent=5 // pred_fallthru
        _
      %p113 = scmp.lt.s32.totalorder %s12, 2
      // Predicated region
      $region17: #{tpu_custom_call.1} parent=5 // pred_check
        %p114 = pneg %p113
      $region18: #{tpu_custom_call.1} parent=5 // pred_check_branch
        %116 = sbr.rel (%p114) target = $region20
      $region19: #{tpu_custom_call.1} parent=5 // pred_region
        // Predicated region
        $region21: #{tpu_custom_call.1} parent=19 // pred_check
          %p117 = pneg %p32
        $region22: #{tpu_custom_call.1} parent=19 // pred_check_branch
          %119 = sbr.rel (%p117) target = $region24
        $region23: #{tpu_custom_call.1} parent=19 // pred_region
          %p120 = scmp.lt.s32.totalorder %s12, 1
          %s121 = scalar_select %p120, %s12, 1
          %s122 = smul.addr %s121, 8
          %s123 = scalar_lea.vmem %s0, %s122
        $region24: #{tpu_custom_call.1} parent=19 // pred_fallthru
          _
      $region20: #{tpu_custom_call.1} parent=5 // pred_fallthru
        _
      %p124 = scmp.le.s32.totalorder 1, %s12
      %p125 = scmp.lt.s32.totalorder %s12, 3
      %p126 = pnand %p124, %p125
      %p127 = pneg %p126
      // Predicated region
      $region25: #{tpu_custom_call.1} parent=5 // pred_check
        _
      $region26: #{tpu_custom_call.1} parent=5 // pred_check_branch
        %129 = sbr.rel (%p126) target = $region28
      $region27: #{tpu_custom_call.1} parent=5 // pred_region
        %s130 = ssub.s32 %s12, 1
        // Predicated region
        $region29: #{tpu_custom_call.1} parent=27 // pred_check
          %p131 = pneg %p59
        $region30: #{tpu_custom_call.1} parent=27 // pred_check_branch
          %133 = sbr.rel (%p131) target = $region32
        $region31: #{tpu_custom_call.1} parent=27 // pred_region
          %134 = dma.done [#allocation3], 2048
        $region32: #{tpu_custom_call.1} parent=27 // pred_fallthru
          _
        %p135 = scmp.lt.s32.totalorder %s17, 1
        %s136 = scalar_select %p135, %s17, 1
        %s137 = smul.addr %s136, 8
        %s138 = scalar_lea.vmem %s0, %s137
        %p139 = pneg %p38
        %p140 = pneg %p35
        %p141 = pneg %p59
        %p142 = pneg %p56
        %p143 = pneg %p85
        %p144 = pneg %p82
        %s145 = sand.u32 %s72, 1
        %s146 = scalar_lea.sflag [#allocation4], %s145
        %s147 = sand.u32 %s72, 1
        %s148 = smul.addr %s147, 8
        %s149 = scalar_lea.vmem [#allocation5], %s148
        %p150 = scmp.lt.s32.totalorder %s17, 1
        %s151 = scalar_select %p150, %s17, 1
        %s152 = smul.addr %s151, 8
        %s153 = scalar_lea.vmem %s0, %s152
        %v154 = vld [vmem:[%s153] sm:$0xff]
        %v155 = vlaneseq
        %v156 = vand.u32 %v155, 127
        %157 = vset.pattern.permute.xlu0 0
        %158 = vperm.xlu0 %157, %v154
        %v159 = vpop.permute.xlu0 %158
        %vm160 = vcmp.eq.s32.totalorder %v156, %v159
        %v161 = vsel %vm160, 1, 0
        %162 = vset.pattern.permute.xlu0 1
        %163 = vperm.xlu0 %162, %v154
        %v164 = vpop.permute.xlu0 %163
        %vm165 = vcmp.eq.s32.totalorder %v156, %v164
        %v166 = vsel %vm165, 1, 0
        %v167 = vadd.s32 %v161, %v166
        %168 = vset.pattern.permute.xlu0 2
        %169 = vperm.xlu0 %168, %v154
        %v170 = vpop.permute.xlu0 %169
        %vm171 = vcmp.eq.s32.totalorder %v156, %v170
        %v172 = vsel %vm171, 1, 0
        %v173 = vadd.s32 %v167, %v172
        %v174 = vcvt.s32.f32 %v173
        %v175 = vld [vmem:[#allocation2] sm:$0xff]
        %v176 = vld [vmem:[#allocation2 + $0x8] sm:$0xff]
        %v177 = vld [vmem:[#allocation2 + $0x10] sm:$0xff]
        %v178 = vld [vmem:[#allocation2 + $0x18] sm:$0xff]
        %v179 = vld [vmem:[#allocation2 + $0x20] sm:$0xff]
        %v180 = vld [vmem:[#allocation2 + $0x28] sm:$0xff]
        %v181 = vld [vmem:[#allocation2 + $0x30] sm:$0xff]
        %v182 = vld [vmem:[#allocation2 + $0x38] sm:$0xff]
        %v183 = vld [vmem:[#allocation2 + $0x40] sm:$0xff]
        %v184 = vld [vmem:[#allocation2 + $0x48] sm:$0xff]
        %v185 = vld [vmem:[#allocation2 + $0x50] sm:$0xff]
        %v186 = vld [vmem:[#allocation2 + $0x58] sm:$0xff]
        %v187 = vld [vmem:[#allocation2 + $0x60] sm:$0xff]
        %v188 = vld [vmem:[#allocation2 + $0x68] sm:$0xff]
        %v189 = vld [vmem:[#allocation2 + $0x70] sm:$0xff]
        %v190 = vld [vmem:[#allocation2 + $0x78] sm:$0xff]
        %191 = vmatprep.subr.mxu0 0.0
        %192 = vmatpush1.msra.mxu0 %v175
        %193 = vmatprep.subr.mxu0 0.0
        %194 = vmatpush1.msra.mxu0 %v176
        %195 = vmatprep.subr.mxu0 0.0
        %196 = vmatpush1.msra.mxu0 %v177
        %197 = vmatprep.subr.mxu0 0.0
        %198 = vmatpush1.msra.mxu0 %v178
        %199 = vmatprep.subr.mxu0 0.0
        %200 = vmatpush1.msra.mxu0 %v179
        %201 = vmatprep.subr.mxu0 0.0
        %202 = vmatpush1.msra.mxu0 %v180
        %203 = vmatprep.subr.mxu0 0.0
        %204 = vmatpush1.msra.mxu0 %v181
        %205 = vmatprep.subr.mxu0 0.0
        %206 = vmatpush1.msra.mxu0 %v182
        %207 = vmatprep.subr.mxu0 0.0
        %208 = vmatpush1.msra.mxu0 %v183
        %209 = vmatprep.subr.mxu0 0.0
        %210 = vmatpush1.msra.mxu0 %v184
        %211 = vmatprep.subr.mxu0 0.0
        %212 = vmatpush1.msra.mxu0 %v185
        %213 = vmatprep.subr.mxu0 0.0
        %214 = vmatpush1.msra.mxu0 %v186
        %215 = vmatprep.subr.mxu0 0.0
        %216 = vmatpush1.msra.mxu0 %v187
        %217 = vmatprep.subr.mxu0 0.0
        %218 = vmatpush1.msra.mxu0 %v188
        %219 = vmatprep.subr.mxu0 0.0
        %220 = vmatpush1.msra.mxu0 %v189
        %221 = vmatprep.subr.mxu0 0.0
        %222 = vmatpush1.msra.mxu0 %v190
        %223 = vmatprep.subr.mxu0 0.0
        %224 = vmatpush1.msra.mxu0 0.0
        %225 = vmatprep.subr.mxu0 0.0
        %226 = vmatpush1.msra.mxu0 0.0
        %227 = vmatprep.subr.mxu0 0.0
        %228 = vmatpush1.msra.mxu0 0.0
        %229 = vmatprep.subr.mxu0 0.0
        %230 = vmatpush1.msra.mxu0 0.0
        %231 = vmatprep.subr.mxu0 0.0
        %232 = vmatpush1.msra.mxu0 0.0
        %233 = vmatprep.subr.mxu0 0.0
        %234 = vmatpush1.msra.mxu0 0.0
        %235 = vmatprep.subr.mxu0 0.0
        %236 = vmatpush1.msra.mxu0 0.0
        %237 = vmatprep.subr.mxu0 0.0
        %238 = vmatpush1.msra.mxu0 0.0
        %239 = vmatprep.subr.mxu0 0.0
        %240 = vmatpush1.msra.mxu0 0.0
        %241 = vmatprep.subr.mxu0 0.0
        %242 = vmatpush1.msra.mxu0 0.0
        %243 = vmatprep.subr.mxu0 0.0
        %244 = vmatpush1.msra.mxu0 0.0
        %245 = vmatprep.subr.mxu0 0.0
        %246 = vmatpush1.msra.mxu0 0.0
        %247 = vmatprep.subr.mxu0 0.0
        %248 = vmatpush1.msra.mxu0 0.0
        %249 = vmatprep.subr.mxu0 0.0
        %250 = vmatpush1.msra.mxu0 0.0
        %251 = vmatprep.subr.mxu0 0.0
        %252 = vmatpush1.msra.mxu0 0.0
        %253 = vmatprep.subr.mxu0 0.0
        %254 = vmatpush1.msra.mxu0 0.0
        %255 = vmatprep.mubr.f32.mxu0 0.0
        %256 = vmatmul.mubr.f32.gmra.mrb[0].mxu0 %v174
        %v257 = vpop.f32.mrb[0].mxu0
        %v258 = vadd.f32 0.0, %v257
        %v259 = vpop.f32.mrb[0].mxu0
        %260 = vdwg.mxu0
        %v261 = vmul.f32 %v258, 0.57735026
        %262 = vst [vmem:[%s149] sm:$0xff] %v261
        %s263 = sand.u32 %s72, 1
        %s264 = scalar_lea.sflag [#allocation4], %s263
        %s265 = sand.u32 %s72, 1
        %s266 = smul.addr %s265, 8
        %s267 = scalar_lea.vmem [#allocation5], %s266
        // Predicated region
        $region33: #{tpu_custom_call.1} parent=27 // pred_check
          %p268 = pneg %p82
        $region34: #{tpu_custom_call.1} parent=27 // pred_check_branch
          %270 = sbr.rel (%p268) target = $region36
        $region35: #{tpu_custom_call.1} parent=27 // pred_region
          %s272 = ssub.s32 128, 128
          %273 = vsyncadd %s264, %s272
          %s274 = smul.addr %s17, 128
          %s275 = scalar_lea.hbm %s2, %s274
          %s277 = sshll.u32 %s267, 4
          %s278 = int_to_ptr.vmem [resolvable:$true] %s277
          %280 = dma.vmem_to_hbm [thread:$0]  %s278, 128, %s275, %s264
        $region36: #{tpu_custom_call.1} parent=27 // pred_fallthru
          _
      $region28: #{tpu_custom_call.1} parent=5 // pred_fallthru
        _
      %p281 = scmp.le.s32.totalorder 2, %s12
      // Predicated region
      $region37: #{tpu_custom_call.1} parent=5 // pred_check
        %p282 = pneg %p281
      $region38: #{tpu_custom_call.1} parent=5 // pred_check_branch
        %284 = sbr.rel (%p282) target = $region40
      $region39: #{tpu_custom_call.1} parent=5 // pred_region
        %s285 = ssub.s32 %s12, 2
        // Predicated region
        $region41: #{tpu_custom_call.1} parent=39 // pred_check
          %p286 = pneg %p88
        $region42: #{tpu_custom_call.1} parent=39 // pred_check_branch
          %288 = sbr.rel (%p286) target = $region44
        $region43: #{tpu_custom_call.1} parent=39 // pred_region
          %s289 = sand.u32 %s73, 1
          %s290 = scalar_lea.sflag [#allocation4], %s289
          %s291 = sand.u32 %s73, 1
          %s292 = smul.addr %s291, 8
          %s293 = scalar_lea.vmem [#allocation5], %s292
          %294 = dma.done %s290, 128
        $region44: #{tpu_custom_call.1} parent=39 // pred_fallthru
          _
      $region40: #{tpu_custom_call.1} parent=5 // pred_fallthru
        _
    $region6: #{tpu_custom_call.1} parent=1 // loop_footer
      %s16 = sadd.s32 1, %s12
    $region7: #{tpu_custom_call.1} parent=1 // loop_footer_branch
      %11 = sbr.rel target = $region3
    $region8: #{tpu_custom_call.1} parent=1 // loop_exit
      _
    %295 = vsyncpa [#allocation3], 1
    %s296 = scalar_lea.sflag [#allocation3], 1
    %297 = vsyncpa %s296, 1
    %298 = vsyncpa [#allocation4], 1
    %s299 = scalar_lea.sflag [#allocation4], 1
    %300 = vsyncpa %s299, 1

</llo_original>
